<compile_context>
chip_gen: v6e
topology: v6e:2x2x1
jax: 0.10.0
libtpu: 0.0.40
codegen_flags: <defaults>
</compile_context>

<pallas_src>
import jax
import jax.numpy as jnp
from jax.experimental import pallas as pl
from jax.experimental.pallas import tpu as pltpu


def alignea_kernel(e1_ref, r_ref, e2_ref, out_ref):
    # Upcast so bf16 / low-precision inputs accumulate in f32 (matches the
    # PyTorch f32 forward numerics).
    diff = (e1_ref[...].astype(jnp.float32)
            + r_ref[...].astype(jnp.float32)
            - e2_ref[...].astype(jnp.float32))
    sq = jnp.sum(diff * diff, axis=1)                       # (tb,) row-sum of squares
    # Lane-dense store: per-row scalars land along the lanes of the
    # (1, 1, tb) output block; the sublane->lane relayout rides the XLU.
    out_ref[...] = sq.reshape(out_ref.shape).astype(out_ref.dtype)


def _round_up(x, m):
    return ((x + m - 1) // m) * m


def _round_down(x, m):
    return (x // m) * m


def _cdiv(a, b):
    return -(-a // b)


# Double-buffered-input block budget and scoped-VMEM limit chosen to fit every
# generation (v7x: 64 MiB physical / 32 MiB default scoped VMEM per core).
_BLOCK_BUDGET_BYTES = 12 * 1024 * 1024
_VMEM_LIMIT_BYTES = 32 * 1024 * 1024


def _pick_tile(B, D, in_itemsize):
    # Sublane packing per dtype width: f32 -> 8 rows/vreg, bf16 -> 16, int8 -> 32.
    sub = {4: 8, 2: 16, 1: 32}.get(in_itemsize, 8)
    b_round = _round_up(B, sub)

    # Largest row count whose 3 double-buffered (tb, D) input blocks fit the budget.
    tb_budget = max(_BLOCK_BUDGET_BYTES // (2 * 3 * D * in_itemsize), sub)

    # Aim for the whole (rounded) batch in one tile, but keep >= 2 grid steps
    # when the batch allows it so the "parallel" axis can use both v7x cores.
    tb = b_round if b_round < 2 * sub else _cdiv(b_round, 2)
    tb = min(tb, tb_budget)

    # Lane-multiple tiles when big enough (unmasked lane-dense output store);
    # otherwise round to the dtype's sublane multiple so the block is legal.
    if tb >= 128:
        tb = _round_down(tb, 128)
    else:
        tb = _round_up(tb, sub)
    return tb


def alignea_forward(e1, r, e2, *, out_dtype=jnp.float32):
    """Pallas AlignEA forward: sum((e1 + r - e2)**2, axis=1) -> shape (B,)."""
    B, D = e1.shape
    assert r.shape == (B, D), r.shape
    assert e2.shape == (B, D), e2.shape

    in_itemsize = jnp.dtype(e1.dtype).itemsize
    tb = _pick_tile(B, D, in_itemsize)
    num_tiles = _cdiv(B, tb)

    # Ragged-tail grid: no input padding.  The last partial block's
    # out-of-range rows produce undefined values that land in output rows
    # >= B and are sliced off below; rows are fully independent so nothing
    # leaks across rows.
    row_spec = pl.BlockSpec((tb, D), lambda i: (i, 0))
    out_spec = pl.BlockSpec((1, 1, tb), lambda i: (i, 0, 0))

    out = pl.pallas_call(
        alignea_kernel,
        out_shape=jax.ShapeDtypeStruct((num_tiles, 1, tb), out_dtype),
        grid_spec=pltpu.PrefetchScalarGridSpec(
            num_scalar_prefetch=0,
            grid=(num_tiles,),
            in_specs=[row_spec, row_spec, row_spec],
            out_specs=out_spec,
        ),
        compiler_params=pltpu.CompilerParams(
            dimension_semantics=("parallel",),
            vmem_limit_bytes=_VMEM_LIMIT_BYTES,
        ),
    )(e1, r, e2)

    return out.reshape(num_tiles * tb)[:B]


def alignea_reference(e1, r, e2):
    """Pure-JAX reference mirroring the PyTorch forward (f32 accumulate)."""
    e1 = e1.astype(jnp.float32)
    r = r.astype(jnp.float32)
    e2 = e2.astype(jnp.float32)
    return jnp.sum((e1 + r - e2) ** 2, axis=1)


if __name__ == "__main__":
    # B deliberately NOT a tile multiple (exercises the ragged-tail grid and a
    # multi-step "parallel" grid); D = 128 keeps vregs / DMAs lane-dense
    # (KGE dims like 100 should be padded to 128 upstream, once, at table
    # creation time).
    B, D = 300, 128
    key = jax.random.PRNGKey(0)
    k1, k2, k3 = jax.random.split(key, 3)
    e1 = jax.random.normal(k1, (B, D), dtype=jnp.float32)
    r = jax.random.normal(k2, (B, D), dtype=jnp.float32)
    e2 = jax.random.normal(k3, (B, D), dtype=jnp.float32)

    # f32 inputs.
    pred = jax.block_until_ready(alignea_forward(e1, r, e2))
    ref = alignea_reference(e1, r, e2)
    assert pred.shape == (B,), pred.shape
    assert jnp.allclose(pred, ref, atol=1e-3, rtol=1e-5), (pred, ref)

    # bf16 inputs halve HBM traffic; kernel upcasts so accumulation stays f32.
    e1b, rb, e2b = (x.astype(jnp.bfloat16) for x in (e1, r, e2))
    pred_b = jax.block_until_ready(alignea_forward(e1b, rb, e2b))
    ref_b = alignea_reference(e1b, rb, e2b)
    assert pred_b.shape == (B,), pred_b.shape
    assert jnp.allclose(pred_b, ref_b, atol=1e-2, rtol=1e-3), (pred_b, ref_b)

    print("KERNEL_OK")
</pallas_src>

<mosaic_0001>
module attributes {stable_mosaic.version = 11 : i64} {
  func.func @alignea_kernel(%arg0: i32, %arg1: memref<128x128xf32, #tpu.memory_space<vmem>>, %arg2: memref<128x128xf32, #tpu.memory_space<vmem>>, %arg3: memref<128x128xf32, #tpu.memory_space<vmem>>, %arg4: memref<1x1x128xf32, #tpu.memory_space<vmem>>) attributes {dimension_semantics = [#tpu.dimension_semantics<parallel>], iteration_bounds = array<i64: 3>, scalar_prefetch = 0 : i64, scratch_operands = 0 : i64, tpu.core_type = #tpu.core_type<tc>, window_params = [{transform_indices = @transform_0, window_bounds = array<i64: 128, 128>}, {transform_indices = @transform_1, window_bounds = array<i64: 128, 128>}, {transform_indices = @transform_2, window_bounds = array<i64: 128, 128>}, {transform_indices = @transform_3, window_bounds = array<i64: 1, 1, 128>}]} {
    %c0 = arith.constant 0 : index
    %c0_0 = arith.constant 0 : index
    %0 = vector.load %arg1[%c0, %c0_0] : memref<128x128xf32, #tpu.memory_space<vmem>>, vector<128x128xf32>
    %c0_1 = arith.constant 0 : index
    %c0_2 = arith.constant 0 : index
    %1 = vector.load %arg2[%c0_1, %c0_2] : memref<128x128xf32, #tpu.memory_space<vmem>>, vector<128x128xf32>
    %2 = arith.addf %0, %1 : vector<128x128xf32>
    %c0_3 = arith.constant 0 : index
    %c0_4 = arith.constant 0 : index
    %3 = vector.load %arg3[%c0_3, %c0_4] : memref<128x128xf32, #tpu.memory_space<vmem>>, vector<128x128xf32>
    %4 = arith.subf %2, %3 : vector<128x128xf32>
    %5 = arith.mulf %4, %4 : vector<128x128xf32>
    %cst = arith.constant dense<0.000000e+00> : vector<128xf32>
    %6 = vector.multi_reduction <add>, %5, %cst [1] : vector<128x128xf32> to vector<128xf32>
    %7 = vector.shape_cast %6 : vector<128xf32> to vector<1x1x128xf32>
    %c0_5 = arith.constant 0 : index
    %c0_6 = arith.constant 0 : index
    %c0_7 = arith.constant 0 : index
    %8 = vector.load %arg4[%c0_5, %c0_6, %c0_7] : memref<1x1x128xf32, #tpu.memory_space<vmem>>, vector<1x1x128xf32>
    tpu.vector_store %arg4[%c0_5, %c0_6, %c0_7], %7 {strides = array<i32>} : memref<1x1x128xf32, #tpu.memory_space<vmem>>, vector<1x1x128xf32>,
    return
  }
  func.func @transform_0(%arg0: i32) -> (i32, i32) {
    %c0_i32 = arith.constant 0 : i32
    %c0_i32_0 = arith.constant 0 : i32
    return %arg0, %c0_i32 : i32, i32
  }
  func.func @transform_1(%arg0: i32) -> (i32, i32) {
    %c0_i32 = arith.constant 0 : i32
    %c0_i32_0 = arith.constant 0 : i32
    return %arg0, %c0_i32 : i32, i32
  }
  func.func @transform_2(%arg0: i32) -> (i32, i32) {
    %c0_i32 = arith.constant 0 : i32
    %c0_i32_0 = arith.constant 0 : i32
    return %arg0, %c0_i32 : i32, i32
  }
  func.func @transform_3(%arg0: i32) -> (i32, i32, i32) {
    %c0_i32 = arith.constant 0 : i32
    %c0_i32_0 = arith.constant 0 : i32
    %c0_i32_1 = arith.constant 0 : i32
    return %arg0, %c0_i32, %c0_i32_0 : i32, i32, i32
  }
}

</mosaic_0001>

<llo_original>
// kernel: tpu_custom_call.1
$region0: #{tpu_custom_call.1}
  #allocation0 [shape = 'u32[]', space=smem, size = 0x4, offset = 0x4, fixed_abs, tag = 'smem constant byte address 0x4 - core index']
  #allocation1 [shape = 'u32[144,128]{1,0:T(1,128)}', space=vmem, size = 0x12000, scoped, tag = 'internal scratch']
  %s0 = inlined_call_operand.hbm [shape: f32[300,128], index: 0, kind: input, shape index: {}]
  %s1 = inlined_call_operand.hbm [shape: f32[300,128], index: 1, kind: input, shape index: {}]
  %s2 = inlined_call_operand.hbm [shape: f32[300,128], index: 2, kind: input, shape index: {}]
  %s3 = inlined_call_operand.hbm [shape: f32[3,1,128], index: 3, kind: output, shape index: {}]
  %s4 = sld [smem:[#allocation0]]
  $region57: #{tpu_custom_call.1} parent=0
    _
  %s6 = ssub.s32 1, %s4
  %s7 = scalar_select 0, %s6, %s4
  $region1: #{tpu_custom_call.1} parent=0
    #allocation2 [shape = 'u8[131072]{0}', space=vmem, size = 0x20000, scoped, tag = 'input window, operand 0']
    #allocation3 [shape = 's32[2]{0}', space=sflag, size = 0x8, scoped, tag = 'scoped memory for tpu_custom_call.1']
    #allocation4 [shape = 's32[2]{0}', space=sflag, size = 0x8, scoped, tag = 'scoped memory for tpu_custom_call.1']
    #allocation5 [shape = 'u8[131072]{0}', space=vmem, size = 0x20000, scoped, tag = 'input window, operand 1']
    #allocation6 [shape = 's32[2]{0}', space=sflag, size = 0x8, scoped, tag = 'scoped memory for tpu_custom_call.1']
    #allocation7 [shape = 'u8[131072]{0}', space=vmem, size = 0x20000, scoped, tag = 'input window, operand 2']
    #allocation8 [shape = 'u8[1024]{0}', space=vmem, size = 0x400, scoped, tag = 'output window, operand 0']
    %8 = vsyncpa [#allocation3], 0
    %s9 = scalar_lea.sflag [#allocation3], 1
    %10 = vsyncpa %s9, 0
    %11 = vsyncpa [#allocation6], 0
    %s12 = scalar_lea.sflag [#allocation6], 1
    %13 = vsyncpa %s12, 0
    %14 = vsyncpa [#allocation4], 0
    %s15 = scalar_lea.sflag [#allocation4], 1
    %16 = vsyncpa %s15, 0
    loop: start=0, step=1, limit=5
    $region2: #{tpu_custom_call.1} parent=1 // loop_pre_header
      _
    $region3: #{tpu_custom_call.1} parent=1 // loop_header
      %s18 = sphi 0, %s22
      %p19 = scmp.ge.s32.totalorder %s18, 5
      %s28 = sphi 0, %s30
      %s31 = sphi 0, %s28
      %s32 = sphi 0, %s31
      %s48 = sphi 0, %s32
      %s54 = sphi 0, %s56
      %s57 = sphi 0, %s54
      %s58 = sphi 0, %s57
      %s74 = sphi 0, %s58
      %s80 = sphi 0, %s82
      %s83 = sphi 0, %s80
      %s84 = sphi 0, %s83
      %s100 = sphi 0, %s84
      %s106 = sphi 0, %s108
      %s109 = sphi 0, %s106
      %s110 = sphi 0, %s109
      %s126 = sphi 0, %s110
    $region4: #{tpu_custom_call.1} parent=1 // loop_header_branch
      %21 = sbr.rel (%p19) target = $region8
    $region5: #{tpu_custom_call.1} parent=1 // loop_body
      %s23 = ssub.s32 %s18, 1
      %s24 = ssub.s32 %s18, 2
      %s25 = sadd.s32 %s18, 1
      %s26 = ssub.s32 %s18, %s25
      %p27 = scmp.eq.s32.totalorder %s26, 0
      %s29 = sadd.s32 %s28, 1
      %s30 = scalar_select %p27, %s28, %s29
      %p33 = pneg %p27
      %p34 = scmp.eq.s32.totalorder %s18, 2
      %p35 = por %p33, %p34
      %p36 = scmp.ne.s32.totalorder %s28, %s31
      %p37 = scmp.eq.s32.totalorder %s18, 0
      %p38 = por %p36, %p37
      %p39 = scmp.ne.s32.totalorder %s28, %s31
      %p40 = scmp.eq.s32.totalorder %s23, 2
      %p41 = por %p39, %p40
      %p42 = scmp.ne.s32.totalorder %s31, %s32
      %p43 = scmp.eq.s32.totalorder %s23, 0
      %p44 = por %p42, %p43
      %p45 = scmp.ne.s32.totalorder %s31, %s32
      %p46 = scmp.eq.s32.totalorder %s24, 2
      %p47 = por %p45, %p46
      %p49 = scmp.ne.s32.totalorder %s32, %s48
      %p50 = scmp.eq.s32.totalorder %s24, 0
      %p51 = por %p49, %p50
      %s52 = ssub.s32 %s18, %s25
      %p53 = scmp.eq.s32.totalorder %s52, 0
      %s55 = sadd.s32 %s54, 1
      %s56 = scalar_select %p53, %s54, %s55
      %p59 = pneg %p53
      %p60 = scmp.eq.s32.totalorder %s18, 2
      %p61 = por %p59, %p60
      %p62 = scmp.ne.s32.totalorder %s54, %s57
      %p63 = scmp.eq.s32.totalorder %s18, 0
      %p64 = por %p62, %p63
      %p65 = scmp.ne.s32.totalorder %s54, %s57
      %p66 = scmp.eq.s32.totalorder %s23, 2
      %p67 = por %p65, %p66
      %p68 = scmp.ne.s32.totalorder %s57, %s58
      %p69 = scmp.eq.s32.totalorder %s23, 0
      %p70 = por %p68, %p69
      %p71 = scmp.ne.s32.totalorder %s57, %s58
      %p72 = scmp.eq.s32.totalorder %s24, 2
      %p73 = por %p71, %p72
      %p75 = scmp.ne.s32.totalorder %s58, %s74
      %p76 = scmp.eq.s32.totalorder %s24, 0
      %p77 = por %p75, %p76
      %s78 = ssub.s32 %s18, %s25
      %p79 = scmp.eq.s32.totalorder %s78, 0
      %s81 = sadd.s32 %s80, 1
      %s82 = scalar_select %p79, %s80, %s81
      %p85 = pneg %p79
      %p86 = scmp.eq.s32.totalorder %s18, 2
      %p87 = por %p85, %p86
      %p88 = scmp.ne.s32.totalorder %s80, %s83
      %p89 = scmp.eq.s32.totalorder %s18, 0
      %p90 = por %p88, %p89
      %p91 = scmp.ne.s32.totalorder %s80, %s83
      %p92 = scmp.eq.s32.totalorder %s23, 2
      %p93 = por %p91, %p92
      %p94 = scmp.ne.s32.totalorder %s83, %s84
      %p95 = scmp.eq.s32.totalorder %s23, 0
      %p96 = por %p94, %p95
      %p97 = scmp.ne.s32.totalorder %s83, %s84
      %p98 = scmp.eq.s32.totalorder %s24, 2
      %p99 = por %p97, %p98
      %p101 = scmp.ne.s32.totalorder %s84, %s100
      %p102 = scmp.eq.s32.totalorder %s24, 0
      %p103 = por %p101, %p102
      %s104 = ssub.s32 %s18, %s25
      %p105 = scmp.eq.s32.totalorder %s104, 0
      %s107 = sadd.s32 %s106, 1
      %s108 = scalar_select %p105, %s106, %s107
      %p111 = pneg %p105
      %p112 = scmp.eq.s32.totalorder %s18, 2
      %p113 = por %p111, %p112
      %p114 = scmp.ne.s32.totalorder %s106, %s109
      %p115 = scmp.eq.s32.totalorder %s18, 0
      %p116 = por %p114, %p115
      %p117 = scmp.ne.s32.totalorder %s106, %s109
      %p118 = scmp.eq.s32.totalorder %s23, 2
      %p119 = por %p117, %p118
      %p120 = scmp.ne.s32.totalorder %s109, %s110
      %p121 = scmp.eq.s32.totalorder %s23, 0
      %p122 = por %p120, %p121
      %p123 = scmp.ne.s32.totalorder %s109, %s110
      %p124 = scmp.eq.s32.totalorder %s24, 2
      %p125 = por %p123, %p124
      %p127 = scmp.ne.s32.totalorder %s110, %s126
      %p128 = scmp.eq.s32.totalorder %s24, 0
      %p129 = por %p127, %p128
      %p130 = scmp.le.s32.totalorder 1, %s18
      %p131 = scmp.lt.s32.totalorder %s18, 4
      %p132 = pnand %p130, %p131
      %p133 = pneg %p132
      // Predicated region
      $region9: #{tpu_custom_call.1} parent=5 // pred_check
        _
      $region10: #{tpu_custom_call.1} parent=5 // pred_check_branch
        %135 = sbr.rel (%p132) target = $region12
      $region11: #{tpu_custom_call.1} parent=5 // pred_region
        %s136 = ssub.s32 %s18, 1
      $region12: #{tpu_custom_call.1} parent=5 // pred_fallthru
        _
      %p137 = scmp.lt.s32.totalorder %s18, 3
      // Predicated region
      $region13: #{tpu_custom_call.1} parent=5 // pred_check
        %p138 = pneg %p137
      $region14: #{tpu_custom_call.1} parent=5 // pred_check_branch
        %140 = sbr.rel (%p138) target = $region16
      $region15: #{tpu_custom_call.1} parent=5 // pred_region
        // Predicated region
        $region17: #{tpu_custom_call.1} parent=15 // pred_check
          %p141 = pneg %p38
        $region18: #{tpu_custom_call.1} parent=15 // pred_check_branch
          %143 = sbr.rel (%p141) target = $region20
        $region19: #{tpu_custom_call.1} parent=15 // pred_region
          %s144 = sand.u32 %s28, 1
          %s145 = scalar_lea.sflag [#allocation3], %s144
          %s146 = sand.u32 %s28, 1
          %s147 = smul.addr %s146, 128
          %s148 = scalar_lea.vmem [#allocation2], %s147
          %s149 = smul.u32 16, %s18
          %s150 = ssub.s32 38, %s149
          %p151 = scmp.lt.s32.totalorder %s150, 16
          %s152 = scalar_select %p151, %s150, 16
          %s153 = smul.u32 128, %s152
          %s155 = ssub.s32 2048, %s153
          %156 = vsyncadd %s145, %s155
          %p157 = scmp.ne.s32.totalorder 0, %s153
          %s158 = smul.addr %s149, 128
          %s159 = scalar_lea.hbm %s0, %s158
          %s160 = smul.u32 8, %s152
          %s161 = sshll.u32 %s148, 4
          %s162 = int_to_ptr.vmem [resolvable:$true] %s161
          %s163 = sshll.u32 %s160, 4
          %167 = dma.hbm_to_vmem [thread:$0]  (%p157), %s159, %s163, %s162, %s145, 128, 128, 8
        $region20: #{tpu_custom_call.1} parent=15 // pred_fallthru
          _
        // Predicated region
        $region21: #{tpu_custom_call.1} parent=15 // pred_check
          %p168 = pneg %p64
        $region22: #{tpu_custom_call.1} parent=15 // pred_check_branch
          %170 = sbr.rel (%p168) target = $region24
        $region23: #{tpu_custom_call.1} parent=15 // pred_region
          %s171 = sand.u32 %s18, 1
          %s172 = scalar_lea.sflag [#allocation6], %s171
          %s173 = sand.u32 %s54, 1
          %s174 = smul.addr %s173, 128
          %s175 = scalar_lea.vmem [#allocation5], %s174
          %s176 = smul.u32 16, %s18
          %s177 = ssub.s32 38, %s176
          %p178 = scmp.lt.s32.totalorder %s177, 16
          %s179 = scalar_select %p178, %s177, 16
          %s180 = smul.u32 128, %s179
          %s182 = ssub.s32 2048, %s180
          %183 = vsyncadd %s172, %s182
          %p184 = scmp.ne.s32.totalorder 0, %s180
          %s185 = smul.addr %s176, 128
          %s186 = scalar_lea.hbm %s1, %s185
          %s187 = smul.u32 8, %s179
          %s188 = sshll.u32 %s175, 4
          %s189 = int_to_ptr.vmem [resolvable:$true] %s188
          %s190 = sshll.u32 %s187, 4
          %194 = dma.hbm_to_vmem [thread:$0]  (%p184), %s186, %s190, %s189, %s172, 128, 128, 8
        $region24: #{tpu_custom_call.1} parent=15 // pred_fallthru
          _
        // Predicated region
        $region25: #{tpu_custom_call.1} parent=15 // pred_check
          %p195 = pneg %p90
        $region26: #{tpu_custom_call.1} parent=15 // pred_check_branch
          %197 = sbr.rel (%p195) target = $region28
        $region27: #{tpu_custom_call.1} parent=15 // pred_region
          %s198 = sand.u32 %s18, 1
          %s199 = scalar_lea.sflag [#allocation6], %s198
          %s200 = sand.u32 %s80, 1
          %s201 = smul.addr %s200, 128
          %s202 = scalar_lea.vmem [#allocation7], %s201
          %s203 = smul.u32 16, %s18
          %s204 = ssub.s32 38, %s203
          %p205 = scmp.lt.s32.totalorder %s204, 16
          %s206 = scalar_select %p205, %s204, 16
          %s207 = smul.u32 128, %s206
          %s209 = ssub.s32 2048, %s207
          %210 = vsyncadd %s199, %s209
          %p211 = scmp.ne.s32.totalorder 0, %s207
          %s212 = smul.addr %s203, 128
          %s213 = scalar_lea.hbm %s2, %s212
          %s214 = smul.u32 8, %s206
          %s215 = sshll.u32 %s202, 4
          %s216 = int_to_ptr.vmem [resolvable:$true] %s215
          %s217 = sshll.u32 %s214, 4
          %221 = dma.hbm_to_vmem [thread:$0]  (%p211), %s213, %s217, %s216, %s199, 128, 128, 8
        $region28: #{tpu_custom_call.1} parent=15 // pred_fallthru
          _
      $region16: #{tpu_custom_call.1} parent=5 // pred_fallthru
        _
      %p222 = scmp.le.s32.totalorder 1, %s18
      %p223 = scmp.lt.s32.totalorder %s18, 4
      %p224 = pnand %p222, %p223
      %p225 = pneg %p224
      // Predicated region
      $region29: #{tpu_custom_call.1} parent=5 // pred_check
        _
      $region30: #{tpu_custom_call.1} parent=5 // pred_check_branch
        %227 = sbr.rel (%p224) target = $region32
      $region31: #{tpu_custom_call.1} parent=5 // pred_region
        %s228 = ssub.s32 %s18, 1
        %s229 = sand.u32 %s31, 1
        %s230 = scalar_lea.sflag [#allocation3], %s229
        %s231 = sand.u32 %s31, 1
        %s232 = smul.addr %s231, 128
        %s233 = scalar_lea.vmem [#allocation2], %s232
        // Predicated region
        $region33: #{tpu_custom_call.1} parent=31 // pred_check
          %p234 = pneg %p44
        $region34: #{tpu_custom_call.1} parent=31 // pred_check_branch
          %236 = sbr.rel (%p234) target = $region36
        $region35: #{tpu_custom_call.1} parent=31 // pred_region
          %237 = dma.done %s230, 2048
        $region36: #{tpu_custom_call.1} parent=31 // pred_fallthru
          _
        %s238 = sand.u32 %s23, 1
        %s239 = scalar_lea.sflag [#allocation6], %s238
        %s240 = sand.u32 %s57, 1
        %s241 = smul.addr %s240, 128
        %s242 = scalar_lea.vmem [#allocation5], %s241
        // Predicated region
        $region37: #{tpu_custom_call.1} parent=31 // pred_check
          %p243 = pneg %p70
        $region38: #{tpu_custom_call.1} parent=31 // pred_check_branch
          %245 = sbr.rel (%p243) target = $region40
        $region39: #{tpu_custom_call.1} parent=31 // pred_region
          %246 = dma.done %s239, 2048
        $region40: #{tpu_custom_call.1} parent=31 // pred_fallthru
          _
        %s247 = sand.u32 %s23, 1
        %s248 = scalar_lea.sflag [#allocation6], %s247
        %s249 = sand.u32 %s83, 1
        %s250 = smul.addr %s249, 128
        %s251 = scalar_lea.vmem [#allocation7], %s250
        // Predicated region
        $region41: #{tpu_custom_call.1} parent=31 // pred_check
          %p252 = pneg %p96
        $region42: #{tpu_custom_call.1} parent=31 // pred_check_branch
          %254 = sbr.rel (%p252) target = $region44
        $region43: #{tpu_custom_call.1} parent=31 // pred_region
          %255 = dma.done %s248, 2048
        $region44: #{tpu_custom_call.1} parent=31 // pred_fallthru
          _
        %s256 = sand.u32 %s31, 1
        %s257 = scalar_lea.sflag [#allocation3], %s256
        %s258 = sand.u32 %s31, 1
        %s259 = smul.addr %s258, 128
        %s260 = scalar_lea.vmem [#allocation2], %s259
        %p261 = pneg %p44
        %p262 = pneg %p41
        %s263 = sand.u32 %s23, 1
        %s264 = scalar_lea.sflag [#allocation6], %s263
        %s265 = sand.u32 %s57, 1
        %s266 = smul.addr %s265, 128
        %s267 = scalar_lea.vmem [#allocation5], %s266
        %p268 = pneg %p70
        %p269 = pneg %p67
        %s270 = sand.u32 %s23, 1
        %s271 = scalar_lea.sflag [#allocation6], %s270
        %s272 = sand.u32 %s83, 1
        %s273 = smul.addr %s272, 128
        %s274 = scalar_lea.vmem [#allocation7], %s273
        %p275 = pneg %p96
        %p276 = pneg %p93
        %p277 = pneg %p122
        %p278 = pneg %p119
        %s279 = sand.u32 %s109, 1
        %s280 = scalar_lea.sflag [#allocation4], %s279
        %s281 = sand.u32 %s109, 1
        %s282 = scalar_lea.vmem [#allocation8], %s281
        %s283 = smul.u32 16, %s23
        %s284 = ssub.s32 38, %s283
        %p285 = scmp.lt.s32.totalorder %s284, 16
        %s286 = scalar_select %p285, %s284, 16
        %s287 = smul.u32 128, %s286
        %s288 = smul.u32 16, %s23
        %s289 = ssub.s32 38, %s288
        %p290 = scmp.lt.s32.totalorder %s289, 16
        %s291 = scalar_select %p290, %s289, 16
        %s292 = smul.u32 128, %s291
        %s293 = smul.u32 16, %s23
        %s294 = ssub.s32 38, %s293
        %p295 = scmp.lt.s32.totalorder %s294, 16
        %s296 = scalar_select %p295, %s294, 16
        %s297 = smul.u32 128, %s296
        %v298 = vld [vmem:[%s233] sm:$0xff]
        %v299 = vld [vmem:[%s233 + $0x8] sm:$0xff]
        %v300 = vld [vmem:[%s233 + $0x10] sm:$0xff]
        %v301 = vld [vmem:[%s233 + $0x18] sm:$0xff]
        %v302 = vld [vmem:[%s233 + $0x20] sm:$0xff]
        %v303 = vld [vmem:[%s233 + $0x28] sm:$0xff]
        %v304 = vld [vmem:[%s233 + $0x30] sm:$0xff]
        %v305 = vld [vmem:[%s233 + $0x38] sm:$0xff]
        %v306 = vld [vmem:[%s233 + $0x40] sm:$0xff]
        %v307 = vld [vmem:[%s233 + $0x48] sm:$0xff]
        %v308 = vld [vmem:[%s233 + $0x50] sm:$0xff]
        %v309 = vld [vmem:[%s233 + $0x58] sm:$0xff]
        %v310 = vld [vmem:[%s233 + $0x60] sm:$0xff]
        %v311 = vld [vmem:[%s233 + $0x68] sm:$0xff]
        %v312 = vld [vmem:[%s233 + $0x70] sm:$0xff]
        %v313 = vld [vmem:[%s233 + $0x78] sm:$0xff]
        %v314 = vld [vmem:[%s242] sm:$0xff]
        %v315 = vld [vmem:[%s242 + $0x8] sm:$0xff]
        %v316 = vld [vmem:[%s242 + $0x10] sm:$0xff]
        %v317 = vld [vmem:[%s242 + $0x18] sm:$0xff]
        %v318 = vld [vmem:[%s242 + $0x20] sm:$0xff]
        %v319 = vld [vmem:[%s242 + $0x28] sm:$0xff]
        %v320 = vld [vmem:[%s242 + $0x30] sm:$0xff]
        %v321 = vld [vmem:[%s242 + $0x38] sm:$0xff]
        %v322 = vld [vmem:[%s242 + $0x40] sm:$0xff]
        %v323 = vld [vmem:[%s242 + $0x48] sm:$0xff]
        %v324 = vld [vmem:[%s242 + $0x50] sm:$0xff]
        %v325 = vld [vmem:[%s242 + $0x58] sm:$0xff]
        %v326 = vld [vmem:[%s242 + $0x60] sm:$0xff]
        %v327 = vld [vmem:[%s242 + $0x68] sm:$0xff]
        %v328 = vld [vmem:[%s242 + $0x70] sm:$0xff]
        %v329 = vld [vmem:[%s242 + $0x78] sm:$0xff]
        %v330 = vadd.f32 %v298, %v314
        %v331 = vadd.f32 %v299, %v315
        %v332 = vadd.f32 %v300, %v316
        %v333 = vadd.f32 %v301, %v317
        %v334 = vadd.f32 %v302, %v318
        %v335 = vadd.f32 %v303, %v319
        %v336 = vadd.f32 %v304, %v320
        %v337 = vadd.f32 %v305, %v321
        %v338 = vadd.f32 %v306, %v322
        %v339 = vadd.f32 %v307, %v323
        %v340 = vadd.f32 %v308, %v324
        %v341 = vadd.f32 %v309, %v325
        %v342 = vadd.f32 %v310, %v326
        %v343 = vadd.f32 %v311, %v327
        %v344 = vadd.f32 %v312, %v328
        %v345 = vadd.f32 %v313, %v329
        %v346 = vld [vmem:[%s251] sm:$0xff]
        %v347 = vld [vmem:[%s251 + $0x8] sm:$0xff]
        %v348 = vld [vmem:[%s251 + $0x10] sm:$0xff]
        %v349 = vld [vmem:[%s251 + $0x18] sm:$0xff]
        %v350 = vld [vmem:[%s251 + $0x20] sm:$0xff]
        %v351 = vld [vmem:[%s251 + $0x28] sm:$0xff]
        %v352 = vld [vmem:[%s251 + $0x30] sm:$0xff]
        %v353 = vld [vmem:[%s251 + $0x38] sm:$0xff]
        %v354 = vld [vmem:[%s251 + $0x40] sm:$0xff]
        %v355 = vld [vmem:[%s251 + $0x48] sm:$0xff]
        %v356 = vld [vmem:[%s251 + $0x50] sm:$0xff]
        %v357 = vld [vmem:[%s251 + $0x58] sm:$0xff]
        %v358 = vld [vmem:[%s251 + $0x60] sm:$0xff]
        %v359 = vld [vmem:[%s251 + $0x68] sm:$0xff]
        %v360 = vld [vmem:[%s251 + $0x70] sm:$0xff]
        %v361 = vld [vmem:[%s251 + $0x78] sm:$0xff]
        %v362 = vsub.f32 %v330, %v346
        %v363 = vsub.f32 %v331, %v347
        %v364 = vsub.f32 %v332, %v348
        %v365 = vsub.f32 %v333, %v349
        %v366 = vsub.f32 %v334, %v350
        %v367 = vsub.f32 %v335, %v351
        %v368 = vsub.f32 %v336, %v352
        %v369 = vsub.f32 %v337, %v353
        %v370 = vsub.f32 %v338, %v354
        %v371 = vsub.f32 %v339, %v355
        %v372 = vsub.f32 %v340, %v356
        %v373 = vsub.f32 %v341, %v357
        %v374 = vsub.f32 %v342, %v358
        %v375 = vsub.f32 %v343, %v359
        %v376 = vsub.f32 %v344, %v360
        %v377 = vsub.f32 %v345, %v361
        %v378 = vmul.f32 %v362, %v362
        %v379 = vmul.f32 %v363, %v363
        %v380 = vmul.f32 %v364, %v364
        %v381 = vmul.f32 %v365, %v365
        %v382 = vmul.f32 %v366, %v366
        %v383 = vmul.f32 %v367, %v367
        %v384 = vmul.f32 %v368, %v368
        %v385 = vmul.f32 %v369, %v369
        %v386 = vmul.f32 %v370, %v370
        %v387 = vmul.f32 %v371, %v371
        %v388 = vmul.f32 %v372, %v372
        %v389 = vmul.f32 %v373, %v373
        %v390 = vmul.f32 %v374, %v374
        %v391 = vmul.f32 %v375, %v375
        %v392 = vmul.f32 %v376, %v376
        %v393 = vmul.f32 %v377, %v377
        %394 = vadd.xlane.f32.xlu0 %v378
        %v395 = vpop.xlane.xlu0 %394
        %396 = vadd.xlane.f32.xlu0 %v379
        %v397 = vpop.xlane.xlu0 %396
        %398 = vadd.xlane.f32.xlu0 %v380
        %v399 = vpop.xlane.xlu0 %398
        %400 = vadd.xlane.f32.xlu0 %v381
        %v401 = vpop.xlane.xlu0 %400
        %402 = vadd.xlane.f32.xlu0 %v382
        %v403 = vpop.xlane.xlu0 %402
        %404 = vadd.xlane.f32.xlu0 %v383
        %v405 = vpop.xlane.xlu0 %404
        %406 = vadd.xlane.f32.xlu0 %v384
        %v407 = vpop.xlane.xlu0 %406
        %408 = vadd.xlane.f32.xlu0 %v385
        %v409 = vpop.xlane.xlu0 %408
        %410 = vadd.xlane.f32.xlu0 %v386
        %v411 = vpop.xlane.xlu0 %410
        %412 = vadd.xlane.f32.xlu0 %v387
        %v413 = vpop.xlane.xlu0 %412
        %414 = vadd.xlane.f32.xlu0 %v388
        %v415 = vpop.xlane.xlu0 %414
        %416 = vadd.xlane.f32.xlu0 %v389
        %v417 = vpop.xlane.xlu0 %416
        %418 = vadd.xlane.f32.xlu0 %v390
        %v419 = vpop.xlane.xlu0 %418
        %420 = vadd.xlane.f32.xlu0 %v391
        %v421 = vpop.xlane.xlu0 %420
        %422 = vadd.xlane.f32.xlu0 %v392
        %v423 = vpop.xlane.xlu0 %422
        %424 = vadd.xlane.f32.xlu0 %v393
        %v425 = vpop.xlane.xlu0 %424
        %v442 = vlaneseq
        %v443 = vand.u32 %v442, 127
        %v444 = vlaneseq
        %v445 = vshrl.u32 %v444, 7
        %v446 = vsub.s32 %v443, %v445
        %v447 = vrot.slane %v395, %v446
        %v448 = vadd.s32 %v443, 4294967288
        %v449 = vlaneseq
        %v450 = vshrl.u32 %v449, 7
        %v451 = vsub.s32 %v448, %v450
        %v452 = vrot.slane %v397, %v451
        %vm453 = vcmask 130112
        %v454 = vsel %vm453, %v452, %v447
        %v455 = vadd.s32 %v443, 4294967280
        %v456 = vlaneseq
        %v457 = vshrl.u32 %v456, 7
        %v458 = vsub.s32 %v455, %v457
        %v459 = vrot.slane %v399, %v458
        %vm460 = vcmask 195712
        %v461 = vsel %vm460, %v459, %v454
        %v462 = vadd.s32 %v443, 4294967272
        %v463 = vlaneseq
        %v464 = vshrl.u32 %v463, 7
        %v465 = vsub.s32 %v462, %v464
        %v466 = vrot.slane %v401, %v465
        %vm467 = vcmask 261312
        %v468 = vsel %vm467, %v466, %v461
        %v469 = vadd.s32 %v443, 4294967264
        %v470 = vlaneseq
        %v471 = vshrl.u32 %v470, 7
        %v472 = vsub.s32 %v469, %v471
        %v473 = vrot.slane %v403, %v472
        %vm474 = vcmask 326912
        %v475 = vsel %vm474, %v473, %v468
        %v476 = vadd.s32 %v443, 4294967256
        %v477 = vlaneseq
        %v478 = vshrl.u32 %v477, 7
        %v479 = vsub.s32 %v476, %v478
        %v480 = vrot.slane %v405, %v479
        %vm481 = vcmask 392512
        %v482 = vsel %vm481, %v480, %v475
        %v483 = vadd.s32 %v443, 4294967248
        %v484 = vlaneseq
        %v485 = vshrl.u32 %v484, 7
        %v486 = vsub.s32 %v483, %v485
        %v487 = vrot.slane %v407, %v486
        %vm488 = vcmask 458112
        %v489 = vsel %vm488, %v487, %v482
        %v490 = vadd.s32 %v443, 4294967240
        %v491 = vlaneseq
        %v492 = vshrl.u32 %v491, 7
        %v493 = vsub.s32 %v490, %v492
        %v494 = vrot.slane %v409, %v493
        %vm495 = vcmask 523712
        %v496 = vsel %vm495, %v494, %v489
        %v497 = vadd.s32 %v443, 4294967232
        %v498 = vlaneseq
        %v499 = vshrl.u32 %v498, 7
        %v500 = vsub.s32 %v497, %v499
        %v501 = vrot.slane %v411, %v500
        %vm502 = vcmask 589312
        %v503 = vsel %vm502, %v501, %v496
        %v504 = vadd.s32 %v443, 4294967224
        %v505 = vlaneseq
        %v506 = vshrl.u32 %v505, 7
        %v507 = vsub.s32 %v504, %v506
        %v508 = vrot.slane %v413, %v507
        %vm509 = vcmask 654912
        %v510 = vsel %vm509, %v508, %v503
        %v511 = vadd.s32 %v443, 4294967216
        %v512 = vlaneseq
        %v513 = vshrl.u32 %v512, 7
        %v514 = vsub.s32 %v511, %v513
        %v515 = vrot.slane %v415, %v514
        %vm516 = vcmask 720512
        %v517 = vsel %vm516, %v515, %v510
        %v518 = vadd.s32 %v443, 4294967208
        %v519 = vlaneseq
        %v520 = vshrl.u32 %v519, 7
        %v521 = vsub.s32 %v518, %v520
        %v522 = vrot.slane %v417, %v521
        %vm523 = vcmask 786112
        %v524 = vsel %vm523, %v522, %v517
        %v525 = vadd.s32 %v443, 4294967200
        %v526 = vlaneseq
        %v527 = vshrl.u32 %v526, 7
        %v528 = vsub.s32 %v525, %v527
        %v529 = vrot.slane %v419, %v528
        %vm530 = vcmask 851712
        %v531 = vsel %vm530, %v529, %v524
        %v532 = vadd.s32 %v443, 4294967192
        %v533 = vlaneseq
        %v534 = vshrl.u32 %v533, 7
        %v535 = vsub.s32 %v532, %v534
        %v536 = vrot.slane %v421, %v535
        %vm537 = vcmask 917312
        %v538 = vsel %vm537, %v536, %v531
        %v539 = vadd.s32 %v443, 4294967184
        %v540 = vlaneseq
        %v541 = vshrl.u32 %v540, 7
        %v542 = vsub.s32 %v539, %v541
        %v543 = vrot.slane %v423, %v542
        %vm544 = vcmask 982912
        %v545 = vsel %vm544, %v543, %v538
        %v546 = vadd.s32 %v443, 4294967176
        %v547 = vlaneseq
        %v548 = vshrl.u32 %v547, 7
        %v549 = vsub.s32 %v546, %v548
        %v550 = vrot.slane %v425, %v549
        %vm551 = vcmask 1048512
        %v552 = vsel %vm551, %v550, %v545
        %554 = vst [vmem:[%s282] sm:$0x1] %v552
        %s555 = sand.u32 %s109, 1
        %s556 = scalar_lea.sflag [#allocation4], %s555
        %s557 = sand.u32 %s109, 1
        %s558 = scalar_lea.vmem [#allocation8], %s557
        // Predicated region
        $region45: #{tpu_custom_call.1} parent=31 // pred_check
          %p559 = pneg %p119
        $region46: #{tpu_custom_call.1} parent=31 // pred_check_branch
          %561 = sbr.rel (%p559) target = $region48
        $region47: #{tpu_custom_call.1} parent=31 // pred_region
          %s563 = ssub.s32 16, 16
          %564 = vsyncadd %s556, %s563
          %s565 = smul.addr %s23, 16
          %s566 = scalar_lea.hbm %s3, %s565
          %s568 = sshll.u32 %s558, 4
          %s569 = int_to_ptr.vmem [resolvable:$true] %s568
          %571 = dma.vmem_to_hbm [thread:$0]  %s569, 16, %s566, %s556
        $region48: #{tpu_custom_call.1} parent=31 // pred_fallthru
          _
      $region32: #{tpu_custom_call.1} parent=5 // pred_fallthru
        _
      %p572 = scmp.le.s32.totalorder 2, %s18
      // Predicated region
      $region49: #{tpu_custom_call.1} parent=5 // pred_check
        %p573 = pneg %p572
      $region50: #{tpu_custom_call.1} parent=5 // pred_check_branch
        %575 = sbr.rel (%p573) target = $region52
      $region51: #{tpu_custom_call.1} parent=5 // pred_region
        %s576 = ssub.s32 %s18, 2
        // Predicated region
        $region53: #{tpu_custom_call.1} parent=51 // pred_check
          %p577 = pneg %p125
        $region54: #{tpu_custom_call.1} parent=51 // pred_check_branch
          %579 = sbr.rel (%p577) target = $region56
        $region55: #{tpu_custom_call.1} parent=51 // pred_region
          %s580 = sand.u32 %s110, 1
          %s581 = scalar_lea.sflag [#allocation4], %s580
          %s582 = sand.u32 %s110, 1
          %s583 = scalar_lea.vmem [#allocation8], %s582
          %584 = dma.done %s581, 16
        $region56: #{tpu_custom_call.1} parent=51 // pred_fallthru
          _
      $region52: #{tpu_custom_call.1} parent=5 // pred_fallthru
        _
    $region6: #{tpu_custom_call.1} parent=1 // loop_footer
      %s22 = sadd.s32 1, %s18
    $region7: #{tpu_custom_call.1} parent=1 // loop_footer_branch
      %17 = sbr.rel target = $region3
    $region8: #{tpu_custom_call.1} parent=1 // loop_exit
      _
    %585 = vsyncpa [#allocation3], 1
    %s586 = scalar_lea.sflag [#allocation3], 1
    %587 = vsyncpa %s586, 1
    %588 = vsyncpa [#allocation6], 1
    %s589 = scalar_lea.sflag [#allocation6], 1
    %590 = vsyncpa %s589, 1
    %591 = vsyncpa [#allocation4], 1
    %s592 = scalar_lea.sflag [#allocation4], 1
    %593 = vsyncpa %s592, 1

</llo_original>
